<compile_context>
chip_gen: v7x
topology: tpu7x:2x2x1
jax: 0.10.0
libtpu: 0.0.40
codegen_flags: <defaults>
</compile_context>

<pallas_src>
import math

import jax
import jax.numpy as jnp
from jax.experimental import pallas as pl
from jax.experimental.pallas import tpu as pltpu


def _pe_add_kernel(pe_ref, x_ref, o_ref):
    """out = x + pe for the current tile.

    pe_ref: (seq_tile, lanes)      -- shared across the (inner) batch axis
    x_ref / o_ref: (1, seq_tile, lanes)
    """
    o_ref[...] = x_ref[...] + pe_ref[...][None].astype(x_ref.dtype)


def _choose_seq_tile(s_packed, lanes, itemsize, sublane, budget=8 << 20):
    """Pick a packed-row tile.

    Budget covers x + out + pe tiles, each double-buffered (6 buffers), and is
    kept at 8 MiB so it fits v5e's 16 MiB scoped-VMEM default (v6e/v7x have
    more headroom; larger tiles only buy the last ~1% of roofline).
    Prefers an exact divisor of s_packed (no tail padding); if none exists the
    wrapper pads the sequence instead of falling back to one huge tile.
    """
    bytes_per_row = lanes * itemsize * 6
    max_rows = max(sublane, budget // bytes_per_row)
    target = max(min(max_rows, 2048), sublane)
    if s_packed <= target:
        return s_packed                              # full extent (always legal)
    target = (target // sublane) * sublane
    t = target
    while t >= sublane:                              # prefer a clean divisor
        if s_packed % t == 0:
            return t
        t -= sublane
    return target                                    # no divisor: wrapper pads


def dynamic_positional_encoding(x, *, seq_tile=None, input_output_alias=False):
    """Pallas implementation of DynamicPositionalEncoding.forward (eval mode).

    x: (B, S, D) float array. Returns x + sinusoidal PE, same shape/dtype.
    `seq_tile` (optional) is in *packed* rows (rows of pack*D_pad lanes).
    `input_output_alias=True` donates x's HBM buffer to the output (use only
    when the caller no longer needs x; otherwise XLA inserts a copy).
    """
    b, s, d = x.shape
    assert d % 2 == 0, "d_model must be even (matches PyTorch sin/cos interleave)"

    # ---- lane-dense layout --------------------------------------------------
    if d % 128 == 0:
        pack, d_pad = 1, d
    elif d < 128 and 128 % d == 0:
        pack, d_pad = 128 // d, d                    # fold seq rows into lanes
    else:
        pack, d_pad = 1, ((d + 127) // 128) * 128    # pad feature dim to 128*
    lanes = d_pad * pack

    itemsize = jnp.dtype(x.dtype).itemsize
    sublane = 16 if itemsize == 2 else 8
    s_packed0 = -(-s // pack)                        # cdiv
    if seq_tile is None:
        seq_tile = _choose_seq_tile(s_packed0, lanes, itemsize, sublane)

    # Pad S so the packed length is an exact multiple of seq_tile (keeps every
    # tile identical and bounded; padding is sliced off after the kernel).
    rows_per_tile = seq_tile * pack
    s_padded = -(-s // rows_per_tile) * rows_per_tile
    s_packed = s_padded // pack

    # ---- PE table, computed once in plain JAX (exact sin/cos, f32) ----------
    position = jnp.arange(s_padded, dtype=jnp.float32)[:, None]          # (Sp, 1)
    div_term = jnp.exp(jnp.arange(0, d, 2, dtype=jnp.float32)
                       * (-(math.log(10000.0) / d)))                     # (D/2,)
    ang = position * div_term                                            # (Sp, D/2)
    pe = jnp.stack([jnp.sin(ang), jnp.cos(ang)], axis=-1).reshape(s_padded, d)
    if d_pad != d:
        pe = jnp.pad(pe, ((0, 0), (0, d_pad - d)))
    pe_packed = pe.astype(x.dtype).reshape(s_packed, lanes)              # (Spk, L)

    # ---- pack / pad x --------------------------------------------------------
    if s_padded != s or d_pad != d:
        x_in = jnp.pad(x, ((0, 0), (0, s_padded - s), (0, d_pad - d)))
    else:
        x_in = x
    xp = x_in.reshape(b, s_packed, lanes)

    # ---- pallas_call ---------------------------------------------------------
    # Grid: (seq_tiles, batch) with batch innermost -> the PE block index is
    # unchanged across consecutive (batch) steps, so it is not re-DMA'd.
    grid = (s_packed // seq_tile, b)
    x_spec = pl.BlockSpec((1, seq_tile, lanes), lambda si, bi: (bi, si, 0))
    pe_spec = pl.BlockSpec((seq_tile, lanes), lambda si, bi: (si, 0))

    alias_kwargs = {"input_output_aliases": {1: 0}} if input_output_alias else {}
    out = pl.pallas_call(
        _pe_add_kernel,
        out_shape=jax.ShapeDtypeStruct((b, s_packed, lanes), x.dtype),
        grid_spec=pltpu.PrefetchScalarGridSpec(
            num_scalar_prefetch=0,
            grid=grid,
            in_specs=[pe_spec, x_spec],
            out_specs=x_spec,
        ),
        compiler_params=pltpu.CompilerParams(
            # No carried state between grid steps -> both axes are independent
            # and shardable across v7x's two TensorCores.
            dimension_semantics=("parallel", "parallel"),
        ),
        **alias_kwargs,
    )(pe_packed, xp)

    out = out.reshape(b, s_padded, d_pad)
    if s_padded != s or d_pad != d:
        out = out[:, :s, :d]
    return out


def _reference(x):
    """Pure-JAX reference matching the PyTorch forward (eval mode)."""
    _, s, d = x.shape
    position = jnp.arange(s, dtype=jnp.float32)[:, None]                 # (S, 1)
    div_term = jnp.exp(jnp.arange(0, d, 2, dtype=jnp.float32)
                       * -(math.log(10000.0) / d))                       # (D/2,)
    pe = jnp.zeros((s, d), jnp.float32)
    pe = pe.at[:, 0::2].set(jnp.sin(position * div_term))
    pe = pe.at[:, 1::2].set(jnp.cos(position * div_term))
    return x + pe[None].astype(x.dtype)


if __name__ == "__main__":
    key = jax.random.PRNGKey(0)

    # Module defaults d_model=64; small batch/seq as in the module's usage.
    B, S, D = 2, 8, 64
    x = jax.random.normal(key, (B, S, D), dtype=jnp.float32)
    out = jax.block_until_ready(dynamic_positional_encoding(x))
    ref = _reference(x)
    assert out.shape == (B, S, D)
    assert jnp.allclose(out, ref, atol=1e-5, rtol=1e-5), "mismatch vs reference"

    # Multiple grid steps along both sequence and batch axes.
    B2, S2, D2 = 2, 256, 64
    x2 = jax.random.normal(jax.random.PRNGKey(1), (B2, S2, D2), dtype=jnp.float32)
    out2 = jax.block_until_ready(dynamic_positional_encoding(x2, seq_tile=32))
    ref2 = _reference(x2)
    assert jnp.allclose(out2, ref2, atol=1e-5, rtol=1e-5), "mismatch (tiled) vs reference"

    # Non-divisible sequence length -> exercises the tail-padding path.
    B3, S3, D3 = 2, 50, 64
    x3 = jax.random.normal(jax.random.PRNGKey(2), (B3, S3, D3), dtype=jnp.float32)
    out3 = jax.block_until_ready(dynamic_positional_encoding(x3, seq_tile=8))
    ref3 = _reference(x3)
    assert out3.shape == (B3, S3, D3)
    assert jnp.allclose(out3, ref3, atol=1e-5, rtol=1e-5), "mismatch (padded) vs reference"

    print("KERNEL_OK")
</pallas_src>

<mosaic_0001>
module attributes {stable_mosaic.version = 11 : i64} {
  func.func @_pe_add_kernel(%arg0: i32, %arg1: i32, %arg2: memref<4x128xf32, #tpu.memory_space<vmem>>, %arg3: memref<1x4x128xf32, #tpu.memory_space<vmem>>, %arg4: memref<1x4x128xf32, #tpu.memory_space<vmem>>) attributes {dimension_semantics = [#tpu.dimension_semantics<parallel>, #tpu.dimension_semantics<parallel>], iteration_bounds = array<i64: 1, 2>, scalar_prefetch = 0 : i64, scratch_operands = 0 : i64, tpu.core_type = #tpu.core_type<tc>, window_params = [{transform_indices = @transform_0, window_bounds = array<i64: 4, 128>}, {transform_indices = @transform_1, window_bounds = array<i64: 1, 4, 128>}, {transform_indices = @transform_2, window_bounds = array<i64: 1, 4, 128>}]} {
    %c0 = arith.constant 0 : index
    %c0_0 = arith.constant 0 : index
    %c0_1 = arith.constant 0 : index
    %0 = vector.load %arg3[%c0, %c0_0, %c0_1] : memref<1x4x128xf32, #tpu.memory_space<vmem>>, vector<1x4x128xf32>
    %c0_2 = arith.constant 0 : index
    %c0_3 = arith.constant 0 : index
    %1 = vector.load %arg2[%c0_2, %c0_3] : memref<4x128xf32, #tpu.memory_space<vmem>>, vector<4x128xf32>
    %2 = vector.shape_cast %1 : vector<4x128xf32> to vector<1x4x128xf32>
    %3 = arith.addf %0, %2 : vector<1x4x128xf32>
    %c0_4 = arith.constant 0 : index
    %c0_5 = arith.constant 0 : index
    %c0_6 = arith.constant 0 : index
    %4 = vector.load %arg4[%c0_4, %c0_5, %c0_6] : memref<1x4x128xf32, #tpu.memory_space<vmem>>, vector<1x4x128xf32>
    tpu.vector_store %arg4[%c0_4, %c0_5, %c0_6], %3 {strides = array<i32>} : memref<1x4x128xf32, #tpu.memory_space<vmem>>, vector<1x4x128xf32>,
    return
  }
  func.func @transform_0(%arg0: i32, %arg1: i32) -> (i32, i32) {
    %c0_i32 = arith.constant 0 : i32
    %c0_i32_0 = arith.constant 0 : i32
    return %arg0, %c0_i32 : i32, i32
  }
  func.func @transform_1(%arg0: i32, %arg1: i32) -> (i32, i32, i32) {
    %c0_i32 = arith.constant 0 : i32
    %c0_i32_0 = arith.constant 0 : i32
    return %arg1, %arg0, %c0_i32 : i32, i32, i32
  }
  func.func @transform_2(%arg0: i32, %arg1: i32) -> (i32, i32, i32) {
    %c0_i32 = arith.constant 0 : i32
    %c0_i32_0 = arith.constant 0 : i32
    return %arg1, %arg0, %c0_i32 : i32, i32, i32
  }
}

</mosaic_0001>

<llo_original>
// kernel: tpu_custom_call.1
$region0: #{tpu_custom_call.1}
  #allocation0 [shape = 'u32[]', space=smem, size = 0x4, offset = 0x4, fixed_abs, tag = 'smem constant byte address 0x4 - core index']
  #allocation1 [shape = 'u32[144,128]{1,0:T(1,128)}', space=vmem, size = 0x12000, scoped, tag = 'internal scratch']
  %s0 = inlined_call_operand.hbm [shape: f32[4,128], index: 0, kind: input, shape index: {}]
  %s1 = inlined_call_operand.hbm [shape: f32[2,4,128], index: 1, kind: input, shape index: {}]
  %s2 = inlined_call_operand.hbm [shape: f32[2,4,128], index: 2, kind: output, shape index: {}]
  %s3 = sld [smem:[#allocation0]]
  $region49: #{tpu_custom_call.1} parent=0
    _
  %s5 = ssub.s32 1, %s3
  %s6 = scalar_select 0, %s5, %s3
  $region1: #{tpu_custom_call.1} parent=0
    #allocation2 [shape = 'u8[2048]{0}', space=vmem, size = 0x800, scoped, tag = 'input window, operand 0, single buffered']
    #allocation3 [shape = 's32[2]{0}', space=sflag, size = 0x8, scoped, tag = 'scoped memory for tpu_custom_call.1']
    #allocation4 [shape = 's32[2]{0}', space=sflag, size = 0x8, scoped, tag = 'scoped memory for tpu_custom_call.1']
    #allocation5 [shape = 'u8[4096]{0}', space=vmem, size = 0x1000, scoped, tag = 'input window, operand 1']
    #allocation6 [shape = 's32[2]{0}', space=sflag, size = 0x8, scoped, tag = 'scoped memory for tpu_custom_call.1']
    #allocation7 [shape = 'u8[4096]{0}', space=vmem, size = 0x1000, scoped, tag = 'output window, operand 0']
    %7 = vsyncpa [#allocation3], 0
    %8 = vsyncpa [#allocation6], 0
    %s9 = scalar_lea.sflag [#allocation6], 1
    %10 = vsyncpa %s9, 0
    %11 = vsyncpa [#allocation4], 0
    %s12 = scalar_lea.sflag [#allocation4], 1
    %13 = vsyncpa %s12, 0
    loop: start=0, step=1, limit=4
    $region2: #{tpu_custom_call.1} parent=1 // loop_pre_header
      _
    $region3: #{tpu_custom_call.1} parent=1 // loop_header
      %s15 = sphi 0, %s19
      %p16 = scmp.ge.s32.totalorder %s15, 4
      %s22 = sphi 0, %s34
      %s23 = sphi 0, %s30
      %s24 = sphi 0, %s22
      %s25 = sphi 0, %s23
      %s26 = sphi 0, %s24
      %s27 = sphi 0, %s25
      %s37 = sphi 0, %s39
      %s40 = sphi 0, %s37
      %s41 = sphi 0, %s40
      %s57 = sphi 0, %s41
      %s65 = sphi 0, %s67
      %s68 = sphi 0, %s65
      %s69 = sphi 0, %s68
      %s85 = sphi 0, %s69
      %s93 = sphi 0, %s95
      %s96 = sphi 0, %s93
      %s97 = sphi 0, %s96
      %s113 = sphi 0, %s97
    $region4: #{tpu_custom_call.1} parent=1 // loop_header_branch
      %18 = sbr.rel (%p16) target = $region8
    $region5: #{tpu_custom_call.1} parent=1 // loop_body
      %s20 = ssub.s32 %s15, 1
      %s21 = ssub.s32 %s15, 2
      %s28 = sadd.s32 1, %s23
      %p29 = scmp.ge.s32.totalorder %s28, 2
      %s30 = scalar_select %p29, 0, %s28
      %s31 = sadd.s32 1, %s22
      %s32 = scalar_select %p29, %s31, %s22
      %p33 = scmp.ge.s32.totalorder %s32, 1
      %s34 = scalar_select %p33, 0, %s32
      %s35 = ssub.s32 %s22, %s34
      %p36 = scmp.eq.s32.totalorder %s35, 0
      %s38 = sadd.s32 %s37, 1
      %s39 = scalar_select %p36, %s37, %s38
      %p42 = pneg %p36
      %p43 = scmp.eq.s32.totalorder %s15, 1
      %p44 = por %p42, %p43
      %p45 = scmp.ne.s32.totalorder %s37, %s40
      %p46 = scmp.eq.s32.totalorder %s15, 0
      %p47 = por %p45, %p46
      %p48 = scmp.ne.s32.totalorder %s37, %s40
      %p49 = scmp.eq.s32.totalorder %s20, 1
      %p50 = por %p48, %p49
      %p51 = scmp.ne.s32.totalorder %s40, %s41
      %p52 = scmp.eq.s32.totalorder %s20, 0
      %p53 = por %p51, %p52
      %p54 = scmp.ne.s32.totalorder %s40, %s41
      %p55 = scmp.eq.s32.totalorder %s21, 1
      %p56 = por %p54, %p55
      %p58 = scmp.ne.s32.totalorder %s41, %s57
      %p59 = scmp.eq.s32.totalorder %s21, 0
      %p60 = por %p58, %p59
      %s61 = ssub.s32 %s23, %s30
      %s62 = ssub.s32 %s22, %s34
      %s63 = sor.u32 %s61, %s62
      %p64 = scmp.eq.s32.totalorder %s63, 0
      %s66 = sadd.s32 %s65, 1
      %s67 = scalar_select %p64, %s65, %s66
      %p70 = pneg %p64
      %p71 = scmp.eq.s32.totalorder %s15, 1
      %p72 = por %p70, %p71
      %p73 = scmp.ne.s32.totalorder %s65, %s68
      %p74 = scmp.eq.s32.totalorder %s15, 0
      %p75 = por %p73, %p74
      %p76 = scmp.ne.s32.totalorder %s65, %s68
      %p77 = scmp.eq.s32.totalorder %s20, 1
      %p78 = por %p76, %p77
      %p79 = scmp.ne.s32.totalorder %s68, %s69
      %p80 = scmp.eq.s32.totalorder %s20, 0
      %p81 = por %p79, %p80
      %p82 = scmp.ne.s32.totalorder %s68, %s69
      %p83 = scmp.eq.s32.totalorder %s21, 1
      %p84 = por %p82, %p83
      %p86 = scmp.ne.s32.totalorder %s69, %s85
      %p87 = scmp.eq.s32.totalorder %s21, 0
      %p88 = por %p86, %p87
      %s89 = ssub.s32 %s23, %s30
      %s90 = ssub.s32 %s22, %s34
      %s91 = sor.u32 %s89, %s90
      %p92 = scmp.eq.s32.totalorder %s91, 0
      %s94 = sadd.s32 %s93, 1
      %s95 = scalar_select %p92, %s93, %s94
      %p98 = pneg %p92
      %p99 = scmp.eq.s32.totalorder %s15, 1
      %p100 = por %p98, %p99
      %p101 = scmp.ne.s32.totalorder %s93, %s96
      %p102 = scmp.eq.s32.totalorder %s15, 0
      %p103 = por %p101, %p102
      %p104 = scmp.ne.s32.totalorder %s93, %s96
      %p105 = scmp.eq.s32.totalorder %s20, 1
      %p106 = por %p104, %p105
      %p107 = scmp.ne.s32.totalorder %s96, %s97
      %p108 = scmp.eq.s32.totalorder %s20, 0
      %p109 = por %p107, %p108
      %p110 = scmp.ne.s32.totalorder %s96, %s97
      %p111 = scmp.eq.s32.totalorder %s21, 1
      %p112 = por %p110, %p111
      %p114 = scmp.ne.s32.totalorder %s97, %s113
      %p115 = scmp.eq.s32.totalorder %s21, 0
      %p116 = por %p114, %p115
      %p117 = scmp.le.s32.totalorder 1, %s15
      %p118 = scmp.lt.s32.totalorder %s15, 3
      %p119 = pnand %p117, %p118
      %p120 = pneg %p119
      // Predicated region
      $region9: #{tpu_custom_call.1} parent=5 // pred_check
        _
      $region10: #{tpu_custom_call.1} parent=5 // pred_check_branch
        %122 = sbr.rel (%p119) target = $region12
      $region11: #{tpu_custom_call.1} parent=5 // pred_region
        %s123 = ssub.s32 %s15, 1
        // Predicated region
        $region13: #{tpu_custom_call.1} parent=11 // pred_check
          %p124 = pneg %p53
        $region14: #{tpu_custom_call.1} parent=11 // pred_check_branch
          %126 = sbr.rel (%p124) target = $region16
        $region15: #{tpu_custom_call.1} parent=11 // pred_region
          %s128 = ssub.s32 64, 64
          %129 = vsyncadd [#allocation3], %s128
          %s130 = smul.addr %s24, 64
          %s131 = scalar_lea.hbm %s0, %s130
          %s133 = sshll.u32 [#allocation2], 4
          %s134 = int_to_ptr.vmem [resolvable:$true] %s133
          %136 = dma.hbm_to_vmem [thread:$0]  %s131, 64, %s134, [#allocation3]
        $region16: #{tpu_custom_call.1} parent=11 // pred_fallthru
          _
      $region12: #{tpu_custom_call.1} parent=5 // pred_fallthru
        _
      %p137 = scmp.lt.s32.totalorder %s15, 2
      // Predicated region
      $region17: #{tpu_custom_call.1} parent=5 // pred_check
        %p138 = pneg %p137
      $region18: #{tpu_custom_call.1} parent=5 // pred_check_branch
        %140 = sbr.rel (%p138) target = $region20
      $region19: #{tpu_custom_call.1} parent=5 // pred_region
        // Predicated region
        $region21: #{tpu_custom_call.1} parent=19 // pred_check
          %p141 = pneg %p75
        $region22: #{tpu_custom_call.1} parent=19 // pred_check_branch
          %143 = sbr.rel (%p141) target = $region24
        $region23: #{tpu_custom_call.1} parent=19 // pred_region
          %s144 = sand.u32 %s65, 1
          %s145 = scalar_lea.sflag [#allocation6], %s144
          %s146 = sand.u32 %s65, 1
          %s147 = smul.addr %s146, 4
          %s148 = scalar_lea.vmem [#allocation5], %s147
          %s150 = ssub.s32 64, 64
          %151 = vsyncadd %s145, %s150
          %s152 = sadd.s32 %s22, %s23
          %s153 = smul.addr %s152, 64
          %s154 = scalar_lea.hbm %s1, %s153
          %s156 = sshll.u32 %s148, 4
          %s157 = int_to_ptr.vmem [resolvable:$true] %s156
          %159 = dma.hbm_to_vmem [thread:$0]  %s154, 64, %s157, %s145
        $region24: #{tpu_custom_call.1} parent=19 // pred_fallthru
          _
      $region20: #{tpu_custom_call.1} parent=5 // pred_fallthru
        _
      %p160 = scmp.le.s32.totalorder 1, %s15
      %p161 = scmp.lt.s32.totalorder %s15, 3
      %p162 = pnand %p160, %p161
      %p163 = pneg %p162
      // Predicated region
      $region25: #{tpu_custom_call.1} parent=5 // pred_check
        _
      $region26: #{tpu_custom_call.1} parent=5 // pred_check_branch
        %165 = sbr.rel (%p162) target = $region28
      $region27: #{tpu_custom_call.1} parent=5 // pred_region
        %s166 = ssub.s32 %s15, 1
        // Predicated region
        $region29: #{tpu_custom_call.1} parent=27 // pred_check
          %p167 = pneg %p53
        $region30: #{tpu_custom_call.1} parent=27 // pred_check_branch
          %169 = sbr.rel (%p167) target = $region32
        $region31: #{tpu_custom_call.1} parent=27 // pred_region
          %170 = dma.done [#allocation3], 64
        $region32: #{tpu_custom_call.1} parent=27 // pred_fallthru
          _
        %s171 = sand.u32 %s68, 1
        %s172 = scalar_lea.sflag [#allocation6], %s171
        %s173 = sand.u32 %s68, 1
        %s174 = smul.addr %s173, 4
        %s175 = scalar_lea.vmem [#allocation5], %s174
        // Predicated region
        $region33: #{tpu_custom_call.1} parent=27 // pred_check
          %p176 = pneg %p81
        $region34: #{tpu_custom_call.1} parent=27 // pred_check_branch
          %178 = sbr.rel (%p176) target = $region36
        $region35: #{tpu_custom_call.1} parent=27 // pred_region
          %179 = dma.done %s172, 64
        $region36: #{tpu_custom_call.1} parent=27 // pred_fallthru
          _
        %p180 = pneg %p53
        %p181 = pneg %p50
        %s182 = sand.u32 %s68, 1
        %s183 = scalar_lea.sflag [#allocation6], %s182
        %s184 = sand.u32 %s68, 1
        %s185 = smul.addr %s184, 4
        %s186 = scalar_lea.vmem [#allocation5], %s185
        %p187 = pneg %p81
        %p188 = pneg %p78
        %p189 = pneg %p109
        %p190 = pneg %p106
        %s191 = sand.u32 %s96, 1
        %s192 = scalar_lea.sflag [#allocation4], %s191
        %s193 = sand.u32 %s96, 1
        %s194 = smul.addr %s193, 4
        %s195 = scalar_lea.vmem [#allocation7], %s194
        %v196 = vld [vmem:[%s175] sm:$0xf]
        %v197 = vld [vmem:[#allocation2] sm:$0xf]
        %v198 = vadd.f32 %v196, %v197
        %199 = vst [vmem:[%s195] sm:$0xf] %v198
        %s200 = sand.u32 %s96, 1
        %s201 = scalar_lea.sflag [#allocation4], %s200
        %s202 = sand.u32 %s96, 1
        %s203 = smul.addr %s202, 4
        %s204 = scalar_lea.vmem [#allocation7], %s203
        // Predicated region
        $region37: #{tpu_custom_call.1} parent=27 // pred_check
          %p205 = pneg %p106
        $region38: #{tpu_custom_call.1} parent=27 // pred_check_branch
          %207 = sbr.rel (%p205) target = $region40
        $region39: #{tpu_custom_call.1} parent=27 // pred_region
          %s209 = ssub.s32 64, 64
          %210 = vsyncadd %s201, %s209
          %s211 = sadd.s32 %s24, %s25
          %s212 = smul.addr %s211, 64
          %s213 = scalar_lea.hbm %s2, %s212
          %s215 = sshll.u32 %s204, 4
          %s216 = int_to_ptr.vmem [resolvable:$true] %s215
          %218 = dma.vmem_to_hbm [thread:$0]  %s216, 64, %s213, %s201
        $region40: #{tpu_custom_call.1} parent=27 // pred_fallthru
          _
      $region28: #{tpu_custom_call.1} parent=5 // pred_fallthru
        _
      %p219 = scmp.le.s32.totalorder 2, %s15
      // Predicated region
      $region41: #{tpu_custom_call.1} parent=5 // pred_check
        %p220 = pneg %p219
      $region42: #{tpu_custom_call.1} parent=5 // pred_check_branch
        %222 = sbr.rel (%p220) target = $region44
      $region43: #{tpu_custom_call.1} parent=5 // pred_region
        %s223 = ssub.s32 %s15, 2
        // Predicated region
        $region45: #{tpu_custom_call.1} parent=43 // pred_check
          %p224 = pneg %p112
        $region46: #{tpu_custom_call.1} parent=43 // pred_check_branch
          %226 = sbr.rel (%p224) target = $region48
        $region47: #{tpu_custom_call.1} parent=43 // pred_region
          %s227 = sand.u32 %s97, 1
          %s228 = scalar_lea.sflag [#allocation4], %s227
          %s229 = sand.u32 %s97, 1
          %s230 = smul.addr %s229, 4
          %s231 = scalar_lea.vmem [#allocation7], %s230
          %232 = dma.done %s228, 64
        $region48: #{tpu_custom_call.1} parent=43 // pred_fallthru
          _
      $region44: #{tpu_custom_call.1} parent=5 // pred_fallthru
        _
    $region6: #{tpu_custom_call.1} parent=1 // loop_footer
      %s19 = sadd.s32 1, %s15
    $region7: #{tpu_custom_call.1} parent=1 // loop_footer_branch
      %14 = sbr.rel target = $region3
    $region8: #{tpu_custom_call.1} parent=1 // loop_exit
      _
    %233 = vsyncpa [#allocation3], 1
    %s234 = scalar_lea.sflag [#allocation3], 1
    %235 = vsyncpa %s234, 1
    %236 = vsyncpa [#allocation6], 1
    %s237 = scalar_lea.sflag [#allocation6], 1
    %238 = vsyncpa %s237, 1
    %239 = vsyncpa [#allocation4], 1
    %s240 = scalar_lea.sflag [#allocation4], 1
    %241 = vsyncpa %s240, 1

</llo_original>
